<compile_context>
chip_gen: v5e
topology: v5e:2x2
jax: 0.10.0
libtpu: 0.0.40
codegen_flags: <defaults>
</compile_context>

<pallas_src>
import jax
import jax.numpy as jnp
from jax.experimental import pallas as pl
from jax.experimental.pallas import tpu as pltpu


def _rup(a, m):
    return ((a + m - 1) // m) * m


# ----------------------------------------------------------------------------
# Fused Pallas kernel: ALL TemporalBlocks + BatchNorm1d (eval) in one launch.
# ----------------------------------------------------------------------------
def _make_decoder_kernel(cfgs, *, K, S, pad_max, Nb, C0, L, C_last,
                         use_roll, matmul_dtype):
    cast_mm = (matmul_dtype != jnp.float32)

    def mm(a, b):
        if cast_mm:
            a = a.astype(matmul_dtype)
            b = b.astype(matmul_dtype)
        return jnp.dot(a, b, preferred_element_type=jnp.float32)

    def kernel(x_ref, mask_ref, w_ref, v_ref, out_ref, act_ref):
        # ---- stage the (Nb, C0, L) input block into the lane layout --------
        # act_ref: (C0_p, W_p).  The zero-fill provides true zeros for the
        # causal left-pad columns, padded channel rows and trailing
        # 128-alignment columns (no stale-VMEM hazard).
        act_ref[...] = jnp.zeros(act_ref.shape, jnp.float32)
        for nb in range(Nb):                      # static unroll (small Nb/core)
            col0 = nb * S + pad_max
            act_ref[0:C0, col0:col0 + L] = x_ref[nb]

        mask = mask_ref[...]                      # (1, W_p): 0 on pad/trailing cols
        h = act_ref[...]

        def shift_right(a, s):
            # col j of result = col (j - s) of `a`.
            # With roll, the wrapped tail lands only in segment-0's causal-pad
            # columns (s <= pad_max), which are re-zeroed by `* mask` before
            # the next conv reads them -> correctness preserved, no copies.
            if s == 0:
                return a
            if use_roll:
                return pltpu.roll(a, shift=s, axis=1)       # XLU rotate
            z = jnp.zeros((a.shape[0], s), jnp.float32)     # fallback path
            return jnp.concatenate([z, a[:, :a.shape[1] - s]], axis=1)

        for cfg in cfgs:                          # static unroll over layers
            (C_in_p, C_out_p, d, has_ds,
             w1_off, w1_cols, w2_off, w2_cols, wd_off, wd_cols,
             jb1, jb2, jbd, jsc, jsh) = cfg
            pad = (K - 1) * d

            # unpack this layer's weights from the packed slabs (static slices)
            w1 = w_ref[w1_off:w1_off + C_out_p, 0:w1_cols]
            w2 = w_ref[w2_off:w2_off + C_out_p, 0:w2_cols]
            b1 = v_ref[0:C_out_p, jb1:jb1 + 1]
            b2 = v_ref[0:C_out_p, jb2:jb2 + 1]
            scale = v_ref[0:C_out_p, jsc:jsc + 1]
            shift = v_ref[0:C_out_p, jsh:jsh + 1]

            def im2col(a):
                # stack the K dilated taps along (8-aligned) channels
                # -> ONE MXU matmul per conv
                return jnp.concatenate(
                    [shift_right(a, pad - k * d) for k in range(K)], axis=0)

            # conv1 (weight-norm folded) + bias + ReLU  [dropout: identity, eval]
            h1 = jnp.maximum(mm(w1, im2col(h)) + b1, 0.0) * mask
            # conv2 + bias + ReLU                       [dropout: identity, eval]
            h2 = jnp.maximum(mm(w2, im2col(h1)) + b2, 0.0)

            # residual branch: 1x1 conv if channels change, else identity
            if has_ds:
                wd = w_ref[wd_off:wd_off + C_out_p, 0:wd_cols]
                bd = v_ref[0:C_out_p, jbd:jbd + 1]
                res = mm(wd, h) + bd
            else:
                res = h
            y = jnp.maximum(h2 + res, 0.0)

            # BatchNorm1d (eval) folded to scale/shift; re-zero pad columns so
            # the next layer's dilated taps read true zeros (roll invariant).
            h = (y * scale + shift) * mask

        # ---- write out per batch element: strip pad columns & channel pad --
        for nb in range(Nb):
            col0 = nb * S + pad_max
            out_ref[nb] = h[0:C_last, col0:col0 + L]

    return kernel


# ----------------------------------------------------------------------------
# Wrapper: weight packing + one pallas_call (no host-side activation relayout)
# ----------------------------------------------------------------------------
def decoder_forward(x, params_list, *, batch_splits=None, use_roll=True,
                    matmul_dtype=jnp.float32):
    """x: (N, C0, L) float32 -> (N, C_out_last, L) float32 (eval mode)."""
    N, C0, L = x.shape
    num_levels = len(params_list)
    K = params_list[0]['w1'].shape[2]
    dilations = [2 ** i for i in range(num_levels)]
    pad_max = (K - 1) * dilations[-1]
    S = L + pad_max

    # ---- device-aware defaults ---------------------------------------------
    try:
        kind = jax.devices()[0].device_kind.lower()
    except Exception:
        kind = ""
    is_v7 = "v7" in kind
    if is_v7:                                   # 64 MiB VMEM / TC -> headroom
        vmem_limit = 48 * 1024 * 1024
    elif ("v5" in kind) or ("v6" in kind):      # 128 MiB physical
        vmem_limit = 100 * 1024 * 1024
    else:
        vmem_limit = 64 * 1024 * 1024

    ch = [C0] + [p['w1'].shape[0] for p in params_list]
    ch_p = [_rup(c, 8) for c in ch]             # 8-sublane aligned channels

    def est_live_bytes(nb):
        wp = _rup(nb * S, 128)
        f = 0
        for i in range(num_levels):
            ci, co = ch_p[i], ch_p[i + 1]
            f = max(f, K * ci + K * co + ci + 4 * co)
        return 4 * wp * f

    if batch_splits is None:
        # v5e/v6e are single-TensorCore: splitting the batch is pure overhead.
        # v7x has 2 TCs: a 2-way "parallel" grid shards work across them.
        G = 2 if (is_v7 and N % 2 == 0 and N >= 2) else 1
        # shrink per-core lane footprint until it fits comfortably in VMEM.
        while est_live_bytes(N // G) > vmem_limit // 3 and N % (2 * G) == 0:
            G *= 2
    else:
        G = batch_splits
    assert N % G == 0, "batch must divide evenly across grid splits"
    Nb = N // G
    W = Nb * S
    W_p = _rup(W, 128)                  # lane-dense internal width

    # ---- input: only a free leading-dim reshape, NO pad/transpose relayout --
    xg = x.astype(jnp.float32).reshape(G, Nb, C0, L)

    # {0,1} mask: 1 on data columns, 0 on per-segment causal pad + trailing pad
    seg = jnp.concatenate([jnp.zeros((pad_max,), jnp.float32),
                           jnp.ones((L,), jnp.float32)])
    mask = jnp.concatenate([jnp.tile(seg, (Nb,)),
                            jnp.zeros((W_p - W,), jnp.float32)]).reshape(1, W_p)

    # ---- pack ALL layer weights into 2 slabs (2 DMAs instead of ~26) --------
    cfgs = []
    w_blocks, v_vecs = [], []
    row_off = 0
    max_w_cols = 0
    C_prev, C_prev_p = C0, ch_p[0]
    for i, p in enumerate(params_list):
        C_out, C_in, Kp = p['w1'].shape
        assert Kp == K and C_in == C_prev
        C_in_p, C_out_p = C_prev_p, _rup(C_out, 8)
        d = dilations[i]

        def pad_w3(w, co_p, ci_p):
            co, ci, k = w.shape
            wz = jnp.zeros((co_p, ci_p, k), jnp.float32).at[:co, :ci, :].set(w)
            # column order k*ci_p + c  == im2col row order (tap-major)
            return jnp.transpose(wz, (0, 2, 1)).reshape(co_p, k * ci_p)

        def pad_v(v, co_p):
            return jnp.zeros((co_p,), jnp.float32).at[:v.shape[0]].set(v)

        w1 = pad_w3(p['w1'], C_out_p, C_in_p)
        w2 = pad_w3(p['w2'], C_out_p, C_out_p)
        w1_off = row_off; row_off += C_out_p; w_blocks.append(w1)
        w2_off = row_off; row_off += C_out_p; w_blocks.append(w2)
        has_ds = 'wd' in p
        if has_ds:
            wd = jnp.zeros((C_out_p, C_in_p), jnp.float32).at[:C_out, :C_in].set(p['wd'])
            wd_off = row_off; row_off += C_out_p; w_blocks.append(wd)
            wd_cols = C_in_p
        else:
            wd_off, wd_cols = 0, 0
        max_w_cols = max(max_w_cols, K * C_in_p, K * C_out_p, wd_cols)

        inv_std = 1.0 / jnp.sqrt(p['rvar'] + 1e-5)
        scale = p['gamma'] * inv_std
        shift = p['beta'] - p['rmean'] * scale
        jb1 = len(v_vecs); v_vecs.append(pad_v(p['b1'], C_out_p))
        jb2 = len(v_vecs); v_vecs.append(pad_v(p['b2'], C_out_p))
        if has_ds:
            jbd = len(v_vecs); v_vecs.append(pad_v(p['bd'], C_out_p))
        else:
            jbd = 0
        jsc = len(v_vecs); v_vecs.append(pad_v(scale, C_out_p))
        jsh = len(v_vecs); v_vecs.append(pad_v(shift, C_out_p))

        cfgs.append((C_in_p, C_out_p, d, has_ds,
                     w1_off, K * C_in_p, w2_off, K * C_out_p, wd_off, wd_cols,
                     jb1, jb2, jbd, jsc, jsh))
        C_prev, C_prev_p = C_out, C_out_p
    C_last, C_last_p = C_prev, C_prev_p

    slab_cols = _rup(max_w_cols, 128)            # lane-dense weight slab
    wslab = jnp.concatenate(
        [jnp.pad(b, ((0, 0), (0, slab_cols - b.shape[1]))) for b in w_blocks],
        axis=0)                                  # (sum C_out_p, slab_cols)
    cmax_p = max(c[1] for c in cfgs)
    vslab = jnp.stack(
        [jnp.pad(v, (0, cmax_p - v.shape[0])) for v in v_vecs], axis=1)  # (cmax_p, n_vec)

    kernel = _make_decoder_kernel(
        tuple(cfgs), K=K, S=S, pad_max=pad_max, Nb=Nb, C0=C0, L=L,
        C_last=C_last, use_roll=use_roll, matmul_dtype=matmul_dtype)

    out = pl.pallas_call(
        kernel,
        out_shape=jax.ShapeDtypeStruct((G, Nb, C_last, L), jnp.float32),
        grid_spec=pltpu.PrefetchScalarGridSpec(
            num_scalar_prefetch=0,
            grid=(G,),
            in_specs=[
                pl.BlockSpec((None, Nb, C0, L), lambda g: (g, 0, 0, 0)),
                pl.BlockSpec(mask.shape, lambda g: (0, 0)),
                pl.BlockSpec(wslab.shape, lambda g: (0, 0)),
                pl.BlockSpec(vslab.shape, lambda g: (0, 0)),
            ],
            out_specs=pl.BlockSpec((None, Nb, C_last, L), lambda g: (g, 0, 0, 0)),
            scratch_shapes=[pltpu.VMEM((ch_p[0], W_p), jnp.float32)],
        ),
        compiler_params=pltpu.CompilerParams(
            dimension_semantics=("parallel",),
            vmem_limit_bytes=vmem_limit),
    )(xg, mask, wslab, vslab)

    return out.reshape(N, C_last, L)


# ----------------------------------------------------------------------------
# Deterministic parameter init (weight_norm reparam done here, as param setup)
# ----------------------------------------------------------------------------
def init_decoder_params(key, hidden_layers, output_channel, kernel_size):
    num_levels = len(hidden_layers)
    params = []
    for i in range(num_levels):
        in_ch = hidden_layers[i]
        out_ch = output_channel if i == num_levels - 1 else hidden_layers[i + 1]
        keys = jax.random.split(key, 13)
        key, ks = keys[0], keys[1:]

        def wnorm(kv, kg, shape):
            v = 0.3 * jax.random.normal(kv, shape, jnp.float32)
            g = jax.random.uniform(kg, (shape[0],), jnp.float32, 0.5, 1.5)
            nrm = jnp.sqrt(jnp.sum(v * v, axis=(1, 2), keepdims=True))
            return g[:, None, None] * v / nrm            # (C_out, C_in, K)

        p = dict(
            w1=wnorm(ks[0], ks[1], (out_ch, in_ch, kernel_size)),
            b1=0.1 * jax.random.normal(ks[2], (out_ch,), jnp.float32),
            w2=wnorm(ks[3], ks[4], (out_ch, out_ch, kernel_size)),
            b2=0.1 * jax.random.normal(ks[5], (out_ch,), jnp.float32),
            gamma=jax.random.uniform(ks[8], (out_ch,), jnp.float32, 0.5, 1.5),
            beta=0.1 * jax.random.normal(ks[9], (out_ch,), jnp.float32),
            rmean=0.1 * jax.random.normal(ks[10], (out_ch,), jnp.float32),
            rvar=jax.random.uniform(ks[11], (out_ch,), jnp.float32, 0.5, 1.5),
        )
        if in_ch != out_ch:   # torch creates a 1x1 downsample conv only here
            p['wd'] = 0.3 * jax.random.normal(ks[6], (out_ch, in_ch), jnp.float32)
            p['bd'] = 0.1 * jax.random.normal(ks[7], (out_ch,), jnp.float32)
        params.append(p)
    return params


# ----------------------------------------------------------------------------
# Pure-JAX reference (for correctness check)
# ----------------------------------------------------------------------------
def _causal_conv_ref(x, w, b, d):
    pad = (w.shape[-1] - 1) * d
    y = jax.lax.conv_general_dilated(
        x, w, window_strides=(1,), padding=[(pad, 0)], rhs_dilation=(d,),
        dimension_numbers=('NCH', 'OIH', 'NCH'),
        precision=jax.lax.Precision.HIGHEST)
    return y + b[None, :, None]


def _ref_block(x, p, d):
    h = jax.nn.relu(_causal_conv_ref(x, p['w1'], p['b1'], d))
    h = jax.nn.relu(_causal_conv_ref(h, p['w2'], p['b2'], d))
    if 'wd' in p:
        res = jnp.einsum('oc,ncl->nol', p['wd'], x) + p['bd'][None, :, None]
    else:
        res = x
    y = jax.nn.relu(h + res)
    inv_std = 1.0 / jnp.sqrt(p['rvar'] + 1e-5)
    scale = p['gamma'] * inv_std
    shift = p['beta'] - p['rmean'] * scale
    return y * scale[None, :, None] + shift[None, :, None]


def decoder_ref(x, params_list):
    out = x
    for i, p in enumerate(params_list):
        out = _ref_block(out, p, 2 ** i)
    return out


if __name__ == "__main__":
    # Decoder(hidden_layers, TemporalBlock, output_channel, kernel_size)
    hidden_layers = [4, 8, 8]   # exercises both downsample and identity residual
    output_channel = 4
    kernel_size = 3
    N, L = 2, 32

    key = jax.random.PRNGKey(0)
    kx, kp = jax.random.split(key)
    x = jax.random.normal(kx, (N, hidden_layers[0], L), jnp.float32)  # (N, C, L)
    params = init_decoder_params(kp, hidden_layers, output_channel, kernel_size)

    y_ref = jax.block_until_ready(decoder_ref(x, params))

    def run(use_roll):
        fwd = jax.jit(lambda xx, pp: decoder_forward(xx, pp, use_roll=use_roll))
        return jax.block_until_ready(fwd(x, params))

    y = run(True)
    err = float(jnp.max(jnp.abs(y - y_ref)))
    if not err < 1e-3:
        # TODO(synk): copy-based shift fallback, only taken if this backend's
        # pltpu.roll rotation direction ever differs from jnp.roll semantics.
        y = run(False)
        err = float(jnp.max(jnp.abs(y - y_ref)))

    assert y.shape == (N, output_channel, L), y.shape
    assert err < 1e-3, f"max abs error vs reference: {err}"
    print("KERNEL_OK")
</pallas_src>

<mosaic_0001>
module attributes {stable_mosaic.version = 11 : i64} {
  func.func @kernel(%arg0: i32, %arg1: memref<1x2x4x32xf32, #tpu.memory_space<vmem>>, %arg2: memref<1x128xf32, #tpu.memory_space<vmem>>, %arg3: memref<64x128xf32, #tpu.memory_space<vmem>>, %arg4: memref<8x14xf32, #tpu.memory_space<vmem>>, %arg5: memref<1x2x4x32xf32, #tpu.memory_space<vmem>>, %arg6: memref<8x128xf32, #tpu.memory_space<vmem>>) attributes {dimension_semantics = [#tpu.dimension_semantics<parallel>], iteration_bounds = array<i64: 1>, scalar_prefetch = 0 : i64, scratch_operands = 1 : i64, tpu.core_type = #tpu.core_type<tc>, window_params = [{transform_indices = @transform_0, window_bounds = array<i64: 1, 2, 4, 32>}, {pipeline_mode = #tpu.pipeline_mode<synchronous>, transform_indices = @transform_1, window_bounds = array<i64: 1, 128>}, {pipeline_mode = #tpu.pipeline_mode<synchronous>, transform_indices = @transform_2, window_bounds = array<i64: 64, 128>}, {pipeline_mode = #tpu.pipeline_mode<synchronous>, transform_indices = @transform_3, window_bounds = array<i64: 8, 14>}, {transform_indices = @transform_4, window_bounds = array<i64: 1, 2, 4, 32>}]} {
    %cst = arith.constant 0.000000e+00 : f32
    %0 = vector.broadcast %cst : f32 to vector<8x128xf32>
    %c0 = arith.constant 0 : index
    %c0_0 = arith.constant 0 : index
    %1 = vector.load %arg6[%c0, %c0_0] : memref<8x128xf32, #tpu.memory_space<vmem>>, vector<8x128xf32>
    tpu.vector_store %arg6[%c0, %c0_0], %0 {strides = array<i32>} : memref<8x128xf32, #tpu.memory_space<vmem>>, vector<8x128xf32>,
    %c0_1 = arith.constant 0 : index
    %c0_2 = arith.constant 0 : index
    %c0_3 = arith.constant 0 : index
    %c0_4 = arith.constant 0 : index
    %2 = vector.load %arg1[%c0_1, %c0_2, %c0_3, %c0_4] : memref<1x2x4x32xf32, #tpu.memory_space<vmem>>, vector<1x1x4x32xf32>
    %3 = vector.shape_cast %2 : vector<1x1x4x32xf32> to vector<4x32xf32>
    %c0_5 = arith.constant 0 : index
    %c8 = arith.constant 8 : index
    %4 = vector.load %arg6[%c0_5, %c8] : memref<8x128xf32, #tpu.memory_space<vmem>>, vector<4x32xf32>
    tpu.vector_store %arg6[%c0_5, %c8], %3 {strides = array<i32>} : memref<8x128xf32, #tpu.memory_space<vmem>>, vector<4x32xf32>,
    %c0_6 = arith.constant 0 : index
    %c1 = arith.constant 1 : index
    %c0_7 = arith.constant 0 : index
    %c0_8 = arith.constant 0 : index
    %5 = vector.load %arg1[%c0_6, %c1, %c0_7, %c0_8] : memref<1x2x4x32xf32, #tpu.memory_space<vmem>>, vector<1x1x4x32xf32>
    %6 = vector.shape_cast %5 : vector<1x1x4x32xf32> to vector<4x32xf32>
    %c0_9 = arith.constant 0 : index
    %c48 = arith.constant 48 : index
    %7 = vector.load %arg6[%c0_9, %c48] : memref<8x128xf32, #tpu.memory_space<vmem>>, vector<4x32xf32>
    tpu.vector_store %arg6[%c0_9, %c48], %6 {strides = array<i32>} : memref<8x128xf32, #tpu.memory_space<vmem>>, vector<4x32xf32>,
    %c0_10 = arith.constant 0 : index
    %c0_11 = arith.constant 0 : index
    %8 = vector.load %arg2[%c0_10, %c0_11] : memref<1x128xf32, #tpu.memory_space<vmem>>, vector<1x128xf32>
    %c0_12 = arith.constant 0 : index
    %c0_13 = arith.constant 0 : index
    %9 = vector.load %arg6[%c0_12, %c0_13] : memref<8x128xf32, #tpu.memory_space<vmem>>, vector<8x128xf32>
    %c0_14 = arith.constant 0 : index
    %c0_15 = arith.constant 0 : index
    %10 = vector.load %arg3[%c0_14, %c0_15] : memref<64x128xf32, #tpu.memory_space<vmem>>, vector<8x24xf32>
    %c8_16 = arith.constant 8 : index
    %c0_17 = arith.constant 0 : index
    %11 = vector.load %arg3[%c8_16, %c0_17] : memref<64x128xf32, #tpu.memory_space<vmem>>, vector<8x24xf32>
    %c0_18 = arith.constant 0 : index
    %c0_19 = arith.constant 0 : index
    %12 = vector.load %arg4[%c0_18, %c0_19] : memref<8x14xf32, #tpu.memory_space<vmem>>, vector<8x1xf32>
    %c0_20 = arith.constant 0 : index
    %c1_21 = arith.constant 1 : index
    %13 = vector.load %arg4[%c0_20, %c1_21] : memref<8x14xf32, #tpu.memory_space<vmem>>, vector<8x1xf32>
    %c0_22 = arith.constant 0 : index
    %c3 = arith.constant 3 : index
    %14 = vector.load %arg4[%c0_22, %c3] : memref<8x14xf32, #tpu.memory_space<vmem>>, vector<8x1xf32>
    %c0_23 = arith.constant 0 : index
    %c4 = arith.constant 4 : index
    %15 = vector.load %arg4[%c0_23, %c4] : memref<8x14xf32, #tpu.memory_space<vmem>>, vector<8x1xf32>
    %c2_i32 = arith.constant 2 : i32
    %16 = tpu.dynamic_rotate %9 by %c2_i32 dim 1 : vector<8x128xf32>, i32 -> vector<8x128xf32>
    %c1_i32 = arith.constant 1 : i32
    %17 = tpu.dynamic_rotate %9 by %c1_i32 dim 1 : vector<8x128xf32>, i32 -> vector<8x128xf32>
    %18 = tpu.concatenate %16, %17, %9 in 0 : vector<8x128xf32>, vector<8x128xf32>, vector<8x128xf32> -> vector<24x128xf32>
    %cst_24 = arith.constant dense<0.000000e+00> : vector<8x128xf32>
    %19 = tpu.matmul %10, %18, %cst_24 {dimension_numbers = #tpu.dot_dimension_numbers<[1], [0], [0], [1], [0, 0, 1, 1], [], []>} : vector<8x24xf32>, vector<24x128xf32>, vector<8x128xf32> -> vector<8x128xf32>
    %20 = vector.broadcast %12 : vector<8x1xf32> to vector<8x128xf32>
    %21 = arith.addf %19, %20 : vector<8x128xf32>
    %cst_25 = arith.constant 0.000000e+00 : f32
    %22 = vector.broadcast %cst_25 : f32 to vector<8x128xf32>
    %23 = arith.maximumf %21, %22 : vector<8x128xf32>
    %24 = vector.broadcast %8 : vector<1x128xf32> to vector<8x128xf32>
    %25 = arith.mulf %23, %24 : vector<8x128xf32>
    %c2_i32_26 = arith.constant 2 : i32
    %26 = tpu.dynamic_rotate %25 by %c2_i32_26 dim 1 : vector<8x128xf32>, i32 -> vector<8x128xf32>
    %c1_i32_27 = arith.constant 1 : i32
    %27 = tpu.dynamic_rotate %25 by %c1_i32_27 dim 1 : vector<8x128xf32>, i32 -> vector<8x128xf32>
    %28 = tpu.concatenate %26, %27, %25 in 0 : vector<8x128xf32>, vector<8x128xf32>, vector<8x128xf32> -> vector<24x128xf32>
    %cst_28 = arith.constant dense<0.000000e+00> : vector<8x128xf32>
    %29 = tpu.matmul %11, %28, %cst_28 {dimension_numbers = #tpu.dot_dimension_numbers<[1], [0], [0], [1], [0, 0, 1, 1], [], []>} : vector<8x24xf32>, vector<24x128xf32>, vector<8x128xf32> -> vector<8x128xf32>
    %30 = vector.broadcast %13 : vector<8x1xf32> to vector<8x128xf32>
    %31 = arith.addf %29, %30 : vector<8x128xf32>
    %cst_29 = arith.constant 0.000000e+00 : f32
    %32 = vector.broadcast %cst_29 : f32 to vector<8x128xf32>
    %33 = arith.maximumf %31, %32 : vector<8x128xf32>
    %c16 = arith.constant 16 : index
    %c0_30 = arith.constant 0 : index
    %34 = vector.load %arg3[%c16, %c0_30] : memref<64x128xf32, #tpu.memory_space<vmem>>, vector<8x8xf32>
    %c0_31 = arith.constant 0 : index
    %c2 = arith.constant 2 : index
    %35 = vector.load %arg4[%c0_31, %c2] : memref<8x14xf32, #tpu.memory_space<vmem>>, vector<8x1xf32>
    %cst_32 = arith.constant dense<0.000000e+00> : vector<8x128xf32>
    %36 = tpu.matmul %34, %9, %cst_32 {dimension_numbers = #tpu.dot_dimension_numbers<[1], [0], [0], [1], [0, 0, 1, 1], [], []>} : vector<8x8xf32>, vector<8x128xf32>, vector<8x128xf32> -> vector<8x128xf32>
    %37 = vector.broadcast %35 : vector<8x1xf32> to vector<8x128xf32>
    %38 = arith.addf %36, %37 : vector<8x128xf32>
    %39 = arith.addf %33, %38 : vector<8x128xf32>
    %cst_33 = arith.constant 0.000000e+00 : f32
    %40 = vector.broadcast %cst_33 : f32 to vector<8x128xf32>
    %41 = arith.maximumf %39, %40 : vector<8x128xf32>
    %42 = vector.broadcast %14 : vector<8x1xf32> to vector<8x128xf32>
    %43 = arith.mulf %41, %42 : vector<8x128xf32>
    %44 = vector.broadcast %15 : vector<8x1xf32> to vector<8x128xf32>
    %45 = arith.addf %43, %44 : vector<8x128xf32>
    %46 = vector.broadcast %8 : vector<1x128xf32> to vector<8x128xf32>
    %47 = arith.mulf %45, %46 : vector<8x128xf32>
    %c24 = arith.constant 24 : index
    %c0_34 = arith.constant 0 : index
    %48 = vector.load %arg3[%c24, %c0_34] : memref<64x128xf32, #tpu.memory_space<vmem>>, vector<8x24xf32>
    %c32 = arith.constant 32 : index
    %c0_35 = arith.constant 0 : index
    %49 = vector.load %arg3[%c32, %c0_35] : memref<64x128xf32, #tpu.memory_space<vmem>>, vector<8x24xf32>
    %c0_36 = arith.constant 0 : index
    %c5 = arith.constant 5 : index
    %50 = vector.load %arg4[%c0_36, %c5] : memref<8x14xf32, #tpu.memory_space<vmem>>, vector<8x1xf32>
    %c0_37 = arith.constant 0 : index
    %c6 = arith.constant 6 : index
    %51 = vector.load %arg4[%c0_37, %c6] : memref<8x14xf32, #tpu.memory_space<vmem>>, vector<8x1xf32>
    %c0_38 = arith.constant 0 : index
    %c7 = arith.constant 7 : index
    %52 = vector.load %arg4[%c0_38, %c7] : memref<8x14xf32, #tpu.memory_space<vmem>>, vector<8x1xf32>
    %c0_39 = arith.constant 0 : index
    %c8_40 = arith.constant 8 : index
    %53 = vector.load %arg4[%c0_39, %c8_40] : memref<8x14xf32, #tpu.memory_space<vmem>>, vector<8x1xf32>
    %c4_i32 = arith.constant 4 : i32
    %54 = tpu.dynamic_rotate %47 by %c4_i32 dim 1 : vector<8x128xf32>, i32 -> vector<8x128xf32>
    %c2_i32_41 = arith.constant 2 : i32
    %55 = tpu.dynamic_rotate %47 by %c2_i32_41 dim 1 : vector<8x128xf32>, i32 -> vector<8x128xf32>
    %56 = tpu.concatenate %54, %55, %47 in 0 : vector<8x128xf32>, vector<8x128xf32>, vector<8x128xf32> -> vector<24x128xf32>
    %cst_42 = arith.constant dense<0.000000e+00> : vector<8x128xf32>
    %57 = tpu.matmul %48, %56, %cst_42 {dimension_numbers = #tpu.dot_dimension_numbers<[1], [0], [0], [1], [0, 0, 1, 1], [], []>} : vector<8x24xf32>, vector<24x128xf32>, vector<8x128xf32> -> vector<8x128xf32>
    %58 = vector.broadcast %50 : vector<8x1xf32> to vector<8x128xf32>
    %59 = arith.addf %57, %58 : vector<8x128xf32>
    %cst_43 = arith.constant 0.000000e+00 : f32
    %60 = vector.broadcast %cst_43 : f32 to vector<8x128xf32>
    %61 = arith.maximumf %59, %60 : vector<8x128xf32>
    %62 = vector.broadcast %8 : vector<1x128xf32> to vector<8x128xf32>
    %63 = arith.mulf %61, %62 : vector<8x128xf32>
    %c4_i32_44 = arith.constant 4 : i32
    %64 = tpu.dynamic_rotate %63 by %c4_i32_44 dim 1 : vector<8x128xf32>, i32 -> vector<8x128xf32>
    %c2_i32_45 = arith.constant 2 : i32
    %65 = tpu.dynamic_rotate %63 by %c2_i32_45 dim 1 : vector<8x128xf32>, i32 -> vector<8x128xf32>
    %66 = tpu.concatenate %64, %65, %63 in 0 : vector<8x128xf32>, vector<8x128xf32>, vector<8x128xf32> -> vector<24x128xf32>
    %cst_46 = arith.constant dense<0.000000e+00> : vector<8x128xf32>
    %67 = tpu.matmul %49, %66, %cst_46 {dimension_numbers = #tpu.dot_dimension_numbers<[1], [0], [0], [1], [0, 0, 1, 1], [], []>} : vector<8x24xf32>, vector<24x128xf32>, vector<8x128xf32> -> vector<8x128xf32>
    %68 = vector.broadcast %51 : vector<8x1xf32> to vector<8x128xf32>
    %69 = arith.addf %67, %68 : vector<8x128xf32>
    %cst_47 = arith.constant 0.000000e+00 : f32
    %70 = vector.broadcast %cst_47 : f32 to vector<8x128xf32>
    %71 = arith.maximumf %69, %70 : vector<8x128xf32>
    %72 = arith.addf %71, %47 : vector<8x128xf32>
    %cst_48 = arith.constant 0.000000e+00 : f32
    %73 = vector.broadcast %cst_48 : f32 to vector<8x128xf32>
    %74 = arith.maximumf %72, %73 : vector<8x128xf32>
    %75 = vector.broadcast %52 : vector<8x1xf32> to vector<8x128xf32>
    %76 = arith.mulf %74, %75 : vector<8x128xf32>
    %77 = vector.broadcast %53 : vector<8x1xf32> to vector<8x128xf32>
    %78 = arith.addf %76, %77 : vector<8x128xf32>
    %79 = vector.broadcast %8 : vector<1x128xf32> to vector<8x128xf32>
    %80 = arith.mulf %78, %79 : vector<8x128xf32>
    %c40 = arith.constant 40 : index
    %c0_49 = arith.constant 0 : index
    %81 = vector.load %arg3[%c40, %c0_49] : memref<64x128xf32, #tpu.memory_space<vmem>>, vector<8x24xf32>
    %c48_50 = arith.constant 48 : index
    %c0_51 = arith.constant 0 : index
    %82 = vector.load %arg3[%c48_50, %c0_51] : memref<64x128xf32, #tpu.memory_space<vmem>>, vector<8x24xf32>
    %c0_52 = arith.constant 0 : index
    %c9 = arith.constant 9 : index
    %83 = vector.load %arg4[%c0_52, %c9] : memref<8x14xf32, #tpu.memory_space<vmem>>, vector<8x1xf32>
    %c0_53 = arith.constant 0 : index
    %c10 = arith.constant 10 : index
    %84 = vector.load %arg4[%c0_53, %c10] : memref<8x14xf32, #tpu.memory_space<vmem>>, vector<8x1xf32>
    %c0_54 = arith.constant 0 : index
    %c12 = arith.constant 12 : index
    %85 = vector.load %arg4[%c0_54, %c12] : memref<8x14xf32, #tpu.memory_space<vmem>>, vector<8x1xf32>
    %c0_55 = arith.constant 0 : index
    %c13 = arith.constant 13 : index
    %86 = vector.load %arg4[%c0_55, %c13] : memref<8x14xf32, #tpu.memory_space<vmem>>, vector<8x1xf32>
    %c8_i32 = arith.constant 8 : i32
    %87 = tpu.dynamic_rotate %80 by %c8_i32 dim 1 : vector<8x128xf32>, i32 -> vector<8x128xf32>
    %c4_i32_56 = arith.constant 4 : i32
    %88 = tpu.dynamic_rotate %80 by %c4_i32_56 dim 1 : vector<8x128xf32>, i32 -> vector<8x128xf32>
    %89 = tpu.concatenate %87, %88, %80 in 0 : vector<8x128xf32>, vector<8x128xf32>, vector<8x128xf32> -> vector<24x128xf32>
    %cst_57 = arith.constant dense<0.000000e+00> : vector<8x128xf32>
    %90 = tpu.matmul %81, %89, %cst_57 {dimension_numbers = #tpu.dot_dimension_numbers<[1], [0], [0], [1], [0, 0, 1, 1], [], []>} : vector<8x24xf32>, vector<24x128xf32>, vector<8x128xf32> -> vector<8x128xf32>
    %91 = vector.broadcast %83 : vector<8x1xf32> to vector<8x128xf32>
    %92 = arith.addf %90, %91 : vector<8x128xf32>
    %cst_58 = arith.constant 0.000000e+00 : f32
    %93 = vector.broadcast %cst_58 : f32 to vector<8x128xf32>
    %94 = arith.maximumf %92, %93 : vector<8x128xf32>
    %95 = vector.broadcast %8 : vector<1x128xf32> to vector<8x128xf32>
    %96 = arith.mulf %94, %95 : vector<8x128xf32>
    %c8_i32_59 = arith.constant 8 : i32
    %97 = tpu.dynamic_rotate %96 by %c8_i32_59 dim 1 : vector<8x128xf32>, i32 -> vector<8x128xf32>
    %c4_i32_60 = arith.constant 4 : i32
    %98 = tpu.dynamic_rotate %96 by %c4_i32_60 dim 1 : vector<8x128xf32>, i32 -> vector<8x128xf32>
    %99 = tpu.concatenate %97, %98, %96 in 0 : vector<8x128xf32>, vector<8x128xf32>, vector<8x128xf32> -> vector<24x128xf32>
    %cst_61 = arith.constant dense<0.000000e+00> : vector<8x128xf32>
    %100 = tpu.matmul %82, %99, %cst_61 {dimension_numbers = #tpu.dot_dimension_numbers<[1], [0], [0], [1], [0, 0, 1, 1], [], []>} : vector<8x24xf32>, vector<24x128xf32>, vector<8x128xf32> -> vector<8x128xf32>
    %101 = vector.broadcast %84 : vector<8x1xf32> to vector<8x128xf32>
    %102 = arith.addf %100, %101 : vector<8x128xf32>
    %cst_62 = arith.constant 0.000000e+00 : f32
    %103 = vector.broadcast %cst_62 : f32 to vector<8x128xf32>
    %104 = arith.maximumf %102, %103 : vector<8x128xf32>
    %c56 = arith.constant 56 : index
    %c0_63 = arith.constant 0 : index
    %105 = vector.load %arg3[%c56, %c0_63] : memref<64x128xf32, #tpu.memory_space<vmem>>, vector<8x8xf32>
    %c0_64 = arith.constant 0 : index
    %c11 = arith.constant 11 : index
    %106 = vector.load %arg4[%c0_64, %c11] : memref<8x14xf32, #tpu.memory_space<vmem>>, vector<8x1xf32>
    %cst_65 = arith.constant dense<0.000000e+00> : vector<8x128xf32>
    %107 = tpu.matmul %105, %80, %cst_65 {dimension_numbers = #tpu.dot_dimension_numbers<[1], [0], [0], [1], [0, 0, 1, 1], [], []>} : vector<8x8xf32>, vector<8x128xf32>, vector<8x128xf32> -> vector<8x128xf32>
    %108 = vector.broadcast %106 : vector<8x1xf32> to vector<8x128xf32>
    %109 = arith.addf %107, %108 : vector<8x128xf32>
    %110 = arith.addf %104, %109 : vector<8x128xf32>
    %cst_66 = arith.constant 0.000000e+00 : f32
    %111 = vector.broadcast %cst_66 : f32 to vector<8x128xf32>
    %112 = arith.maximumf %110, %111 : vector<8x128xf32>
    %113 = vector.broadcast %85 : vector<8x1xf32> to vector<8x128xf32>
    %114 = arith.mulf %112, %113 : vector<8x128xf32>
    %115 = vector.broadcast %86 : vector<8x1xf32> to vector<8x128xf32>
    %116 = arith.addf %114, %115 : vector<8x128xf32>
    %117 = vector.broadcast %8 : vector<1x128xf32> to vector<8x128xf32>
    %118 = arith.mulf %116, %117 : vector<8x128xf32>
    %119 = vector.extract_strided_slice %118 {offsets = [0, 8], sizes = [4, 32], strides = [1, 1]} : vector<8x128xf32> to vector<4x32xf32>
    %c0_67 = arith.constant 0 : index
    %c0_68 = arith.constant 0 : index
    %c0_69 = arith.constant 0 : index
    %c0_70 = arith.constant 0 : index
    %120 = vector.load %arg5[%c0_67, %c0_68, %c0_69, %c0_70] : memref<1x2x4x32xf32, #tpu.memory_space<vmem>>, vector<1x1x4x32xf32>
    %121 = vector.shape_cast %120 : vector<1x1x4x32xf32> to vector<4x32xf32>
    %122 = vector.shape_cast %119 : vector<4x32xf32> to vector<1x1x4x32xf32>
    tpu.vector_store %arg5[%c0_67, %c0_68, %c0_69, %c0_70], %122 {strides = array<i32>} : memref<1x2x4x32xf32, #tpu.memory_space<vmem>>, vector<1x1x4x32xf32>,
    %123 = vector.extract_strided_slice %118 {offsets = [0, 48], sizes = [4, 32], strides = [1, 1]} : vector<8x128xf32> to vector<4x32xf32>
    %c0_71 = arith.constant 0 : index
    %c1_72 = arith.constant 1 : index
    %c0_73 = arith.constant 0 : index
    %c0_74 = arith.constant 0 : index
    %124 = vector.load %arg5[%c0_71, %c1_72, %c0_73, %c0_74] : memref<1x2x4x32xf32, #tpu.memory_space<vmem>>, vector<1x1x4x32xf32>
    %125 = vector.shape_cast %124 : vector<1x1x4x32xf32> to vector<4x32xf32>
    %126 = vector.shape_cast %123 : vector<4x32xf32> to vector<1x1x4x32xf32>
    tpu.vector_store %arg5[%c0_71, %c1_72, %c0_73, %c0_74], %126 {strides = array<i32>} : memref<1x2x4x32xf32, #tpu.memory_space<vmem>>, vector<1x1x4x32xf32>,
    return
  }
  func.func @transform_0(%arg0: i32) -> (i32, i32, i32, i32) {
    %c0_i32 = arith.constant 0 : i32
    %c0_i32_0 = arith.constant 0 : i32
    %c0_i32_1 = arith.constant 0 : i32
    %c0_i32_2 = arith.constant 0 : i32
    return %arg0, %c0_i32, %c0_i32_0, %c0_i32_1 : i32, i32, i32, i32
  }
  func.func @transform_1(%arg0: i32) -> (i32, i32) {
    %c0_i32 = arith.constant 0 : i32
    %c0_i32_0 = arith.constant 0 : i32
    %c0_i32_1 = arith.constant 0 : i32
    return %c0_i32, %c0_i32_0 : i32, i32
  }
  func.func @transform_2(%arg0: i32) -> (i32, i32) {
    %c0_i32 = arith.constant 0 : i32
    %c0_i32_0 = arith.constant 0 : i32
    %c0_i32_1 = arith.constant 0 : i32
    return %c0_i32, %c0_i32_0 : i32, i32
  }
  func.func @transform_3(%arg0: i32) -> (i32, i32) {
    %c0_i32 = arith.constant 0 : i32
    %c0_i32_0 = arith.constant 0 : i32
    %c0_i32_1 = arith.constant 0 : i32
    return %c0_i32, %c0_i32_0 : i32, i32
  }
  func.func @transform_4(%arg0: i32) -> (i32, i32, i32, i32) {
    %c0_i32 = arith.constant 0 : i32
    %c0_i32_0 = arith.constant 0 : i32
    %c0_i32_1 = arith.constant 0 : i32
    %c0_i32_2 = arith.constant 0 : i32
    return %arg0, %c0_i32, %c0_i32_0, %c0_i32_1 : i32, i32, i32, i32
  }
}

</mosaic_0001>

<llo_original>
// kernel: tile.6
$region0: #{tile.6}
  #allocation0 [shape = 's32[1]{0}', space=sflag, size = 0x4, scoped, tag = 'scoped memory for tile.6']
  %s0 = inlined_call_operand.vmem [shape: f32[40], index: 0, kind: input, shape index: {}]
  %s1 = inlined_call_operand.vmem [shape: f32[2,40], index: 1, kind: output, shape index: {}]
  // Predicated region
  $region2: #{tile.6} parent=0 // pred_check
    _
  $region3: #{tile.6} parent=0 // pred_check_branch
    %3 = sbr.rel (0) target = $region5
  $region4: #{tile.6} parent=0 // pred_region
    _
  $region5: #{tile.6} parent=0 // pred_fallthru
    _
  %v4 = vld [vmem:[%s0] ss:$0 sm:$0xff]
  %5 = vst [vmem:[%s1] sm:$0x3] %v4

// kernel: tile.7
$region0: #{tile.7}
  %s0 = inlined_call_operand.vmem [shape: f32[2,40], index: 0, kind: input, shape index: {}]
  %s1 = inlined_call_operand.vmem [shape: f32[80], index: 1, kind: output, shape index: {}]
  $region1: #{tile.7} parent=0
    #allocation0 [shape = 'u8[4096]{0}', space=vmem, size = 0x1000, scoped, tag = 'scoped mem for output reshape']
    #allocation1 [shape = 'u8[4096]{0}', space=vmem, size = 0x1000, scoped, tag = 'scoped mem for input reshape']
    %s3 = ssub.s32 4, 1
    %v4 = vld [vmem:[%s0] sm:%s3]
    %5 = vst [vmem:[#allocation1] sm:%s3] %v4
    %v6 = vld [vmem:[#allocation1] sm:$0x1]
    %vm7 = vcmask 326656
    %8 = vst.msk [vmem:[#allocation0] sm:$0x1] %vm7, %v6
    %s9 = scalar_lea.vmem [#allocation1], 1
    %v10 = vld [vmem:[%s9] sm:$0x1]
    %11 = vrot.lane.b32.xlu0 %v10, 40
    %v12 = vpop.permute.xlu0 %11
    %vm13 = vcmask 654656
    %14 = vst.msk [vmem:[#allocation0] sm:$0x1] %vm13, %v12
    %s16 = ssub.s32 2, 1
    %v17 = vld [vmem:[#allocation0] sm:%s16]
    %s19 = ssub.s32 2, 1
    %20 = vst [vmem:[%s1] sm:%s19] %v17

// kernel: _lambda_.1
$region0: #{_lambda_.1}
  #allocation0 [shape = 'u32[]', space=smem, size = 0x4, offset = 0x4, fixed_abs, tag = 'smem constant byte address 0x4 - core index']
  #allocation1 [shape = 'u32[72,128]{1,0:T(1,128)}', space=vmem, size = 0x9000, scoped, tag = 'internal scratch']
  #allocation2 [shape = 'f32[8,128]{1,0:T(8,128)}', space=vmem, size = 0x1000, scoped, tag = 'scratch operand']
  %s0 = inlined_call_operand.vmem [shape: f32[1,2,4,32], index: 0, kind: input, shape index: {}]
  %s1 = inlined_call_operand.vmem [shape: f32[1,128], index: 1, kind: input, shape index: {}]
  %s2 = inlined_call_operand.vmem [shape: f32[64,128], index: 2, kind: input, shape index: {}]
  %s3 = inlined_call_operand.vmem [shape: f32[8,14], index: 3, kind: input, shape index: {}]
  %s4 = inlined_call_operand.hbm [shape: f32[1,2,4,32], index: 4, kind: output, shape index: {}]
  %s5 = sld [smem:[#allocation0]]
  $region26: #{_lambda_.1} parent=0
    _
  %s7 = ssub.s32 1, %s5
  %s8 = scalar_select 0, %s7, %s5
  $region1: #{_lambda_.1} parent=0
    #allocation3 [shape = 'u8[4096]{0}', space=vmem, size = 0x1000, scoped, tag = 'output window, operand 0, single buffered']
    #allocation4 [shape = 's32[1]{0}', space=sflag, size = 0x4, scoped, tag = 'scoped memory for _lambda_.1']
    %9 = vsyncpa [#allocation4], 0
    // Predicated region
    $region2: #{_lambda_.1} parent=1 // pred_check
      _
    $region3: #{_lambda_.1} parent=1 // pred_check_branch
      %11 = sbr.rel (0) target = $region5
    $region4: #{_lambda_.1} parent=1 // pred_region
      _
    $region5: #{_lambda_.1} parent=1 // pred_fallthru
      _
    // Predicated region
    $region6: #{_lambda_.1} parent=1 // pred_check
      _
    $region7: #{_lambda_.1} parent=1 // pred_check_branch
      %13 = sbr.rel (0) target = $region9
    $region8: #{_lambda_.1} parent=1 // pred_region
      _
    $region9: #{_lambda_.1} parent=1 // pred_fallthru
      _
    // Predicated region
    $region10: #{_lambda_.1} parent=1 // pred_check
      _
    $region11: #{_lambda_.1} parent=1 // pred_check_branch
      %15 = sbr.rel (0) target = $region13
    $region12: #{_lambda_.1} parent=1 // pred_region
      _
    $region13: #{_lambda_.1} parent=1 // pred_fallthru
      _
    // Predicated region
    $region14: #{_lambda_.1} parent=1 // pred_check
      _
    $region15: #{_lambda_.1} parent=1 // pred_check_branch
      %17 = sbr.rel (0) target = $region17
    $region16: #{_lambda_.1} parent=1 // pred_region
      _
    $region17: #{_lambda_.1} parent=1 // pred_fallthru
      _
    %18 = vst [vmem:[#allocation2] sm:$0xff] 0.0
    %v19 = vld [vmem:[%s0] sm:$0xf]
    %21 = vrot.lane.b32.xlu0 %v19, 8
    %v22 = vpop.permute.xlu0 %21
    %vm24 = vcmask 322624
    %25 = vst.msk [vmem:[#allocation2] sm:$0xf] %vm24, %v22
    %s26 = scalar_lea.vmem %s0, 4
    %v27 = vld [vmem:[%s26] sm:$0xf]
    %29 = vrot.lane.b32.xlu0 %v27, 48
    %v30 = vpop.permute.xlu0 %29
    %vm32 = vcmask 650624
    %33 = vst.msk [vmem:[#allocation2] sm:$0xf] %vm32, %v30
    %v34 = vld [vmem:[%s1] sm:$0x1]
    %v35 = vld [vmem:[#allocation2] sm:$0xff]
    %v36 = vld [vmem:[%s2] sm:$0xff]
    %v37 = vld [vmem:[%s2 + $0x8] sm:$0xff]
    %v38 = vld [vmem:[%s3] sm:$0xff]
    %39 = vrot.lane.b32.xlu0 %v35, 2
    %v40 = vpop.permute.xlu0 %39
    %41 = vrot.lane.b32.xlu0 %v35, 1
    %v42 = vpop.permute.xlu0 %41
    %44 = vset.pattern.permute.xlu0 0
    %45 = vperm.xlu0 %44, %v38
    %v46 = vpop.permute.xlu0 %45
    %vm48 = vcmask 195584
    %v50 = vsel %vm48, %v36, 0
    %52 = vmatpush.msra.mxu0 0.0
    %53 = vmatpush.msra.mxu0 0.0
    %54 = vmatpush.msra.mxu0 0.0
    %55 = vmatpush.msra.mxu0 0.0
    %56 = vmatpush.msra.mxu0 0.0
    %57 = vmatpush.msra.mxu0 0.0
    %58 = vmatpush.msra.mxu0 0.0
    %59 = vmatpush.msra.mxu0 0.0
    %60 = vmatpush.msra.mxu0 0.0
    %61 = vmatpush.msra.mxu0 0.0
    %62 = vmatpush.msra.mxu0 0.0
    %63 = vmatpush.msra.mxu0 0.0
    %64 = vmatpush.msra.mxu0 0.0
    %65 = vmatpush.msra.mxu0 %v35
    %66 = vmatpush.msra.mxu0 %v42
    %67 = vmatpush.msra.mxu0 %v40
    %68 = vmatmul.f32.gmra.mxu0 %v50
    %v69 = vpop.f32.mrf.mxu0
    %v70 = vadd.f32 %v46, %v69
    %71 = vdwg.mxu0
    %v72 = vmax.f32 %v70, 0.0
    %v74 = vperm.slane %v34, 0
    %v76 = vmul.f32 %v72, %v74
    %77 = vrot.lane.b32.xlu0 %v76, 2
    %v78 = vpop.permute.xlu0 %77
    %79 = vrot.lane.b32.xlu0 %v76, 1
    %v80 = vpop.permute.xlu0 %79
    %81 = vset.pattern.permute.xlu0 1
    %82 = vperm.xlu0 %81, %v38
    %v83 = vpop.permute.xlu0 %82
    %v86 = vsel %vm48, %v37, 0
    %88 = vmatpush.msra.mxu0 0.0
    %89 = vmatpush.msra.mxu0 0.0
    %90 = vmatpush.msra.mxu0 0.0
    %91 = vmatpush.msra.mxu0 0.0
    %92 = vmatpush.msra.mxu0 0.0
    %93 = vmatpush.msra.mxu0 0.0
    %94 = vmatpush.msra.mxu0 0.0
    %95 = vmatpush.msra.mxu0 0.0
    %96 = vmatpush.msra.mxu0 0.0
    %97 = vmatpush.msra.mxu0 0.0
    %98 = vmatpush.msra.mxu0 0.0
    %99 = vmatpush.msra.mxu0 0.0
    %100 = vmatpush.msra.mxu0 0.0
    %101 = vmatpush.msra.mxu0 %v76
    %102 = vmatpush.msra.mxu0 %v80
    %103 = vmatpush.msra.mxu0 %v78
    %104 = vmatmul.f32.gmra.mxu0 %v86
    %v105 = vpop.f32.mrf.mxu0
    %v106 = vadd.f32 %v83, %v105
    %107 = vdwg.mxu0
    %v108 = vmax.f32 %v106, 0.0
    %v109 = vld [vmem:[%s2 + $0x10] sm:$0xff]
    %110 = vset.pattern.permute.xlu0 2
    %111 = vperm.xlu0 %110, %v38
    %v112 = vpop.permute.xlu0 %111
    %vm114 = vcmask 64512
    %v116 = vsel %vm114, %v109, 0
    %118 = vmatpush.msra.mxu0 0.0
    %119 = vmatpush.msra.mxu0 0.0
    %120 = vmatpush.msra.mxu0 0.0
    %121 = vmatpush.msra.mxu0 0.0
    %122 = vmatpush.msra.mxu0 0.0
    %123 = vmatpush.msra.mxu0 0.0
    %124 = vmatpush.msra.mxu0 0.0
    %125 = vmatpush.msra.mxu0 0.0
    %126 = vmatpush.msra.mxu0 0.0
    %127 = vmatpush.msra.mxu0 0.0
    %128 = vmatpush.msra.mxu0 0.0
    %129 = vmatpush.msra.mxu0 0.0
    %130 = vmatpush.msra.mxu0 0.0
    %131 = vmatpush.msra.mxu0 0.0
    %132 = vmatpush.msra.mxu0 0.0
    %133 = vmatpush.msra.mxu0 %v35
    %134 = vmatmul.f32.gmra.mxu0 %v116
    %v135 = vpop.f32.mrf.mxu0
    %v136 = vadd.f32 %v112, %v135
    %137 = vdwg.mxu0
    %v138 = vadd.f32 %v108, %v136
    %v139 = vmax.f32 %v138, 0.0
    %140 = vset.pattern.permute.xlu0 3
    %141 = vperm.xlu0 %140, %v38
    %v142 = vpop.permute.xlu0 %141
    %v144 = vmul.f32 %v139, %v142
    %145 = vset.pattern.permute.xlu0 4
    %146 = vperm.xlu0 %145, %v38
    %v147 = vpop.permute.xlu0 %146
    %v149 = vadd.f32 %v144, %v147
    %v150 = vmul.f32 %v149, %v74
    %v151 = vld [vmem:[%s2 + $0x18] sm:$0xff]
    %v152 = vld [vmem:[%s2 + $0x20] sm:$0xff]
    %153 = vrot.lane.b32.xlu0 %v150, 4
    %v154 = vpop.permute.xlu0 %153
    %155 = vrot.lane.b32.xlu0 %v150, 2
    %v156 = vpop.permute.xlu0 %155
    %157 = vset.pattern.permute.xlu0 5
    %158 = vperm.xlu0 %157, %v38
    %v159 = vpop.permute.xlu0 %158
    %v162 = vsel %vm48, %v151, 0
    %164 = vmatpush.msra.mxu0 0.0
    %165 = vmatpush.msra.mxu0 0.0
    %166 = vmatpush.msra.mxu0 0.0
    %167 = vmatpush.msra.mxu0 0.0
    %168 = vmatpush.msra.mxu0 0.0
    %169 = vmatpush.msra.mxu0 0.0
    %170 = vmatpush.msra.mxu0 0.0
    %171 = vmatpush.msra.mxu0 0.0
    %172 = vmatpush.msra.mxu0 0.0
    %173 = vmatpush.msra.mxu0 0.0
    %174 = vmatpush.msra.mxu0 0.0
    %175 = vmatpush.msra.mxu0 0.0
    %176 = vmatpush.msra.mxu0 0.0
    %177 = vmatpush.msra.mxu0 %v150
    %178 = vmatpush.msra.mxu0 %v156
    %179 = vmatpush.msra.mxu0 %v154
    %180 = vmatmul.f32.gmra.mxu0 %v162
    %v181 = vpop.f32.mrf.mxu0
    %v182 = vadd.f32 %v159, %v181
    %183 = vdwg.mxu0
    %v184 = vmax.f32 %v182, 0.0
    %v185 = vmul.f32 %v184, %v74
    %186 = vrot.lane.b32.xlu0 %v185, 4
    %v187 = vpop.permute.xlu0 %186
    %188 = vrot.lane.b32.xlu0 %v185, 2
    %v189 = vpop.permute.xlu0 %188
    %190 = vset.pattern.permute.xlu0 6
    %191 = vperm.xlu0 %190, %v38
    %v192 = vpop.permute.xlu0 %191
    %v195 = vsel %vm48, %v152, 0
    %197 = vmatpush.msra.mxu0 0.0
    %198 = vmatpush.msra.mxu0 0.0
    %199 = vmatpush.msra.mxu0 0.0
    %200 = vmatpush.msra.mxu0 0.0
    %201 = vmatpush.msra.mxu0 0.0
    %202 = vmatpush.msra.mxu0 0.0
    %203 = vmatpush.msra.mxu0 0.0
    %204 = vmatpush.msra.mxu0 0.0
    %205 = vmatpush.msra.mxu0 0.0
    %206 = vmatpush.msra.mxu0 0.0
    %207 = vmatpush.msra.mxu0 0.0
    %208 = vmatpush.msra.mxu0 0.0
    %209 = vmatpush.msra.mxu0 0.0
    %210 = vmatpush.msra.mxu0 %v185
    %211 = vmatpush.msra.mxu0 %v189
    %212 = vmatpush.msra.mxu0 %v187
    %213 = vmatmul.f32.gmra.mxu0 %v195
    %v214 = vpop.f32.mrf.mxu0
    %v215 = vadd.f32 %v192, %v214
    %216 = vdwg.mxu0
    %v217 = vmax.f32 %v215, 0.0
    %v218 = vadd.f32 %v217, %v150
    %v219 = vmax.f32 %v218, 0.0
    %220 = vset.pattern.permute.xlu0 7
    %221 = vperm.xlu0 %220, %v38
    %v222 = vpop.permute.xlu0 %221
    %v224 = vmul.f32 %v219, %v222
    %225 = vset.pattern.permute.xlu0 8
    %226 = vperm.xlu0 %225, %v38
    %v227 = vpop.permute.xlu0 %226
    %v229 = vadd.f32 %v224, %v227
    %v230 = vmul.f32 %v229, %v74
    %v231 = vld [vmem:[%s2 + $0x28] sm:$0xff]
    %v232 = vld [vmem:[%s2 + $0x30] sm:$0xff]
    %233 = vrot.lane.b32.xlu0 %v230, 8
    %v234 = vpop.permute.xlu0 %233
    %235 = vrot.lane.b32.xlu0 %v230, 4
    %v236 = vpop.permute.xlu0 %235
    %237 = vset.pattern.permute.xlu0 9
    %238 = vperm.xlu0 %237, %v38
    %v239 = vpop.permute.xlu0 %238
    %v242 = vsel %vm48, %v231, 0
    %244 = vmatpush.msra.mxu0 0.0
    %245 = vmatpush.msra.mxu0 0.0
    %246 = vmatpush.msra.mxu0 0.0
    %247 = vmatpush.msra.mxu0 0.0
    %248 = vmatpush.msra.mxu0 0.0
    %249 = vmatpush.msra.mxu0 0.0
    %250 = vmatpush.msra.mxu0 0.0
    %251 = vmatpush.msra.mxu0 0.0
    %252 = vmatpush.msra.mxu0 0.0
    %253 = vmatpush.msra.mxu0 0.0
    %254 = vmatpush.msra.mxu0 0.0
    %255 = vmatpush.msra.mxu0 0.0
    %256 = vmatpush.msra.mxu0 0.0
    %257 = vmatpush.msra.mxu0 %v230
    %258 = vmatpush.msra.mxu0 %v236
    %259 = vmatpush.msra.mxu0 %v234
    %260 = vmatmul.f32.gmra.mxu0 %v242
    %v261 = vpop.f32.mrf.mxu0
    %v262 = vadd.f32 %v239, %v261
    %263 = vdwg.mxu0
    %v264 = vmax.f32 %v262, 0.0
    %v265 = vmul.f32 %v264, %v74
    %266 = vrot.lane.b32.xlu0 %v265, 8
    %v267 = vpop.permute.xlu0 %266
    %268 = vrot.lane.b32.xlu0 %v265, 4
    %v269 = vpop.permute.xlu0 %268
    %270 = vset.pattern.permute.xlu0 10
    %271 = vperm.xlu0 %270, %v38
    %v272 = vpop.permute.xlu0 %271
    %v275 = vsel %vm48, %v232, 0
    %277 = vmatpush.msra.mxu0 0.0
    %278 = vmatpush.msra.mxu0 0.0
    %279 = vmatpush.msra.mxu0 0.0
    %280 = vmatpush.msra.mxu0 0.0
    %281 = vmatpush.msra.mxu0 0.0
    %282 = vmatpush.msra.mxu0 0.0
    %283 = vmatpush.msra.mxu0 0.0
    %284 = vmatpush.msra.mxu0 0.0
    %285 = vmatpush.msra.mxu0 0.0
    %286 = vmatpush.msra.mxu0 0.0
    %287 = vmatpush.msra.mxu0 0.0
    %288 = vmatpush.msra.mxu0 0.0
    %289 = vmatpush.msra.mxu0 0.0
    %290 = vmatpush.msra.mxu0 %v265
    %291 = vmatpush.msra.mxu0 %v269
    %292 = vmatpush.msra.mxu0 %v267
    %293 = vmatmul.f32.gmra.mxu0 %v275
    %v294 = vpop.f32.mrf.mxu0
    %v295 = vadd.f32 %v272, %v294
    %296 = vdwg.mxu0
    %v297 = vmax.f32 %v295, 0.0
    %v298 = vld [vmem:[%s2 + $0x38] sm:$0xff]
    %299 = vset.pattern.permute.xlu0 11
    %300 = vperm.xlu0 %299, %v38
    %v301 = vpop.permute.xlu0 %300
    %v304 = vsel %vm114, %v298, 0
    %306 = vmatpush.msra.mxu0 0.0
    %307 = vmatpush.msra.mxu0 0.0
    %308 = vmatpush.msra.mxu0 0.0
    %309 = vmatpush.msra.mxu0 0.0
    %310 = vmatpush.msra.mxu0 0.0
    %311 = vmatpush.msra.mxu0 0.0
    %312 = vmatpush.msra.mxu0 0.0
    %313 = vmatpush.msra.mxu0 0.0
    %314 = vmatpush.msra.mxu0 0.0
    %315 = vmatpush.msra.mxu0 0.0
    %316 = vmatpush.msra.mxu0 0.0
    %317 = vmatpush.msra.mxu0 0.0
    %318 = vmatpush.msra.mxu0 0.0
    %319 = vmatpush.msra.mxu0 0.0
    %320 = vmatpush.msra.mxu0 0.0
    %321 = vmatpush.msra.mxu0 %v230
    %322 = vmatmul.f32.gmra.mxu0 %v304
    %v323 = vpop.f32.mrf.mxu0
    %v324 = vadd.f32 %v301, %v323
    %325 = vdwg.mxu0
    %v326 = vadd.f32 %v297, %v324
    %v327 = vmax.f32 %v326, 0.0
    %328 = vset.pattern.permute.xlu0 12
    %329 = vperm.xlu0 %328, %v38
    %v330 = vpop.permute.xlu0 %329
    %v332 = vmul.f32 %v327, %v330
    %333 = vset.pattern.permute.xlu0 13
    %334 = vperm.xlu0 %333, %v38
    %v335 = vpop.permute.xlu0 %334
    %v337 = vadd.f32 %v332, %v335
    %v338 = vmul.f32 %v337, %v74
    %340 = vrot.lane.b32.xlu0 %v338, 120
    %v341 = vpop.permute.xlu0 %340
    %vm343 = vcmask 257024
    %344 = vst.msk [vmem:[#allocation3] sm:$0xf] %vm343, %v341
    %345 = vrot.lane.b32.xlu0 %v338, 80
    %v346 = vpop.permute.xlu0 %345
    %s348 = scalar_lea.vmem [#allocation3], 4
    %349 = vst.msk [vmem:[%s348] sm:$0xf] %vm343, %v346
    // Predicated region
    $region18: #{_lambda_.1} parent=1 // pred_check
      _
    $region19: #{_lambda_.1} parent=1 // pred_check_branch
      %351 = sbr.rel (0) target = $region21
    $region20: #{_lambda_.1} parent=1 // pred_region
      %353 = vsyncadd [#allocation4], 0
      %s354 = sshll.u32 [#allocation3], 4
      %s355 = int_to_ptr.vmem [resolvable:$true] %s354
      %s356 = sshll.u32 %s4, 4
      %s357 = int_to_ptr.hbm [resolvable:$true] %s356
      %362 = dma.vmem_to_hbm [thread:$0]  %s355, 128, %s357, [#allocation4], 64, 64, 4
    $region21: #{_lambda_.1} parent=1 // pred_fallthru
      _
    // Predicated region
    $region22: #{_lambda_.1} parent=1 // pred_check
      _
    $region23: #{_lambda_.1} parent=1 // pred_check_branch
      %364 = sbr.rel (0) target = $region25
    $region24: #{_lambda_.1} parent=1 // pred_region
      %366 = dma.done [#allocation4], 128
    $region25: #{_lambda_.1} parent=1 // pred_fallthru
      _
    %367 = vsyncpa [#allocation4], 1

</llo_original>
